<compile_context>
chip_gen: v7x
topology: tpu7x:2x2x1
jax: 0.10.0
libtpu: 0.0.40
codegen_flags: <defaults>
</compile_context>

<pallas_src>
import numpy as np
import jax
import jax.numpy as jnp
from jax.experimental import pallas as pl
from jax.experimental.pallas import tpu as pltpu

# ----- small, module-consistent sizes ---------------------------------------
MAX_LENGTH = 8          # torch: 53
H = 32                  # torch: 768 (BERT hidden size)
D_IN = 2 * H + 1        # torch: 768*2 + 1
D_HID = 2 * H + 2       # torch: 770
OUTPUT_LAYER = 5        # torch: len(labels)
B = 2                   # batch
SEQ = MAX_LENGTH + 1    # +1 because vecs skip the [CLS] position


# ----- fused kernel: span MLP + availability mask + log_softmax --------------
def span_head_kernel(viT_ref, vjT_ref, pind_ref, avail_ref,
                     w1aT_ref, w1bT_ref, w1c_ref, b1_ref, w2T_ref, b2_ref,
                     out_ref):
    viT = viT_ref[0]          # (H, SS)   start-token vectors, span axis last
    vjT = vjT_ref[0]          # (H, SS)   end-token vectors,   span axis last
    pind = pind_ref[0]        # (1, SS)   predicate-indication feature (0/1/2)
    avail = avail_ref[...]    # (1, SS)   availability mask (0/1)

    # concat([vi, vj, pind]) @ W1 expressed as split matmuls in transposed
    # layout (algebraically identical, keeps span axis lane-dense throughout).
    hT = jnp.dot(w1aT_ref[...], viT, preferred_element_type=jnp.float32)
    hT = hT + jnp.dot(w1bT_ref[...], vjT, preferred_element_type=jnp.float32)
    hT = hT + w1c_ref[...] * pind                 # (Dh,1)*(1,SS) -> (Dh,SS)
    hT = jnp.maximum(hT + b1_ref[...], 0.0)       # ReLU
    zT = jnp.dot(w2T_ref[...], hT,
                 preferred_element_type=jnp.float32) + b2_ref[...]   # (L, SS)

    # unavailable spans contribute exact zeros (torch's `zeros` branch) and
    # still participate in the softmax, exactly like the reference.
    zT = zT * avail

    # log_softmax over the span axis (last dim -> lane reduction)
    m = jnp.max(zT, axis=-1, keepdims=True)
    lse = m + jnp.log(jnp.sum(jnp.exp(zT - m), axis=-1, keepdims=True))
    out_ref[0] = zT - lse                         # (L, SS)


# ----- wrapper ---------------------------------------------------------------
def bert_classifier_forward(hidden_states, pred_spans, avail_matrix,
                            W1, b1, W2, b2):
    S = MAX_LENGTH
    SS = S * S
    L = W2.shape[1]
    Dh = W1.shape[1]
    Bn = hidden_states.shape[0]

    # vecs[i] = hidden_states[:, i+1, :]
    vecs = hidden_states[:, 1:1 + S, :]                      # (B, S, H)

    # gather start / end token vectors for every candidate span (i, j),
    # flat span index c = i*S + j, span axis last (lane-dense).
    i_idx = jnp.repeat(jnp.arange(S), S)                     # (SS,)
    j_idx = jnp.tile(jnp.arange(S), S)                       # (SS,)
    viT = jnp.transpose(vecs[:, i_idx, :], (0, 2, 1))        # (B, H, SS)
    vjT = jnp.transpose(vecs[:, j_idx, :], (0, 2, 1))        # (B, H, SS)

    # predicate-indication feature (vectorized torch bookkeeping):
    #   2 if (i,j) == pred_span, 1 if start<=i<=j<=end, else 0
    ii = i_idx[None, :]
    jj = j_idx[None, :]
    s = pred_spans[:, 0][:, None]
    e = pred_spans[:, 1][:, None]
    exact = (ii == s) & (jj == e)
    inside = (s <= ii) & (ii <= jj) & (jj <= e)
    pred_ind = jnp.where(exact, 2.0,
                         jnp.where(inside, 1.0, 0.0)).astype(jnp.float32)
    pred_ind = pred_ind.reshape(Bn, 1, SS)                   # (B, 1, SS)

    avail = (avail_matrix >= 1).astype(jnp.float32).reshape(1, SS)

    # weights in transposed layout (split-W1 trick)
    W1aT = W1[:H].T                        # (Dh, H)
    W1bT = W1[H:2 * H].T                   # (Dh, H)
    w1c = W1[2 * H:2 * H + 1].T            # (Dh, 1)
    b1c = b1.reshape(Dh, 1)
    W2T = W2.T                             # (L, Dh)
    b2c = b2.reshape(L, 1)

    # NOTE: at real BERT size (S=53, H=768) the gathered (H, S*S) operand per
    # batch element is ~8.6 MB f32; tile the span axis and set vmem_limit_bytes
    # accordingly.  At this toy size everything fits in one VMEM block.
    out = pl.pallas_call(
        span_head_kernel,
        out_shape=jax.ShapeDtypeStruct((Bn, L, SS), jnp.float32),
        grid_spec=pltpu.PrefetchScalarGridSpec(
            num_scalar_prefetch=0,
            grid=(Bn,),
            in_specs=[
                pl.BlockSpec((1, H, SS), lambda b: (b, 0, 0)),   # vi^T
                pl.BlockSpec((1, H, SS), lambda b: (b, 0, 0)),   # vj^T
                pl.BlockSpec((1, 1, SS), lambda b: (b, 0, 0)),   # pred indication
                pl.BlockSpec((1, SS), lambda b: (0, 0)),         # availability
                pl.BlockSpec((Dh, H), lambda b: (0, 0)),         # W1[:H]^T
                pl.BlockSpec((Dh, H), lambda b: (0, 0)),         # W1[H:2H]^T
                pl.BlockSpec((Dh, 1), lambda b: (0, 0)),         # W1[2H]^T
                pl.BlockSpec((Dh, 1), lambda b: (0, 0)),         # b1
                pl.BlockSpec((L, Dh), lambda b: (0, 0)),         # W2^T
                pl.BlockSpec((L, 1), lambda b: (0, 0)),          # b2
            ],
            out_specs=pl.BlockSpec((1, L, SS), lambda b: (b, 0, 0)),
        ),
        compiler_params=pltpu.CompilerParams(
            dimension_semantics=("parallel",)),                 # batch rows independent
    )(viT, vjT, pred_ind, avail, W1aT, W1bT, w1c, b1c, W2T, b2c)

    return out   # (B, OUTPUT_LAYER, MAX_LENGTH**2)


# ----- pure numpy reference mirroring the torch forward ----------------------
def torch_like_reference(hid, pred_spans, avail, W1, b1, W2, b2):
    hid = np.asarray(hid); pred_spans = np.asarray(pred_spans)
    avail = np.asarray(avail)
    W1 = np.asarray(W1); b1 = np.asarray(b1)
    W2 = np.asarray(W2); b2 = np.asarray(b2)
    Bn = hid.shape[0]; L = W2.shape[1]
    outs = []
    for i in range(MAX_LENGTH):
        for j in range(MAX_LENGTH):
            if avail[i, j] >= 1:
                vi = hid[:, i + 1, :]
                vj = hid[:, j + 1, :]
                inds = []
                for b in range(Bn):
                    st, en = int(pred_spans[b, 0]), int(pred_spans[b, 1])
                    if (i, j) == (st, en):
                        inds.append(2.0)
                    elif st <= i <= j <= en:
                        inds.append(1.0)
                    else:
                        inds.append(0.0)
                x = np.concatenate(
                    [vi, vj, np.array(inds, np.float32).reshape(Bn, 1)], axis=1)
                h = np.maximum(x @ W1 + b1, 0.0)
                o = h @ W2 + b2
            else:
                o = np.zeros((Bn, L), np.float32)
            outs.append(o)
    outs = np.stack(outs, axis=1)                       # (B, S*S, L)
    m = outs.max(axis=1, keepdims=True)
    lse = m + np.log(np.exp(outs - m).sum(axis=1, keepdims=True))
    res = outs - lse                                    # log_softmax over dim=1
    return np.transpose(res, (0, 2, 1))                 # (B, L, S*S)


if __name__ == "__main__":
    key = jax.random.PRNGKey(0)
    k1, k2, k3, k4, k5 = jax.random.split(key, 5)

    hidden_states = jax.random.normal(k1, (B, SEQ, H), dtype=jnp.float32)

    # deterministic parameter init matching the torch __init__ distributions
    W1 = 0.02 * jax.random.normal(k2, (D_IN, D_HID), dtype=jnp.float32)
    b1 = jax.random.normal(k3, (D_HID,), dtype=jnp.float32)
    W2 = 0.02 * jax.random.normal(k4, (D_HID, OUTPUT_LAYER), dtype=jnp.float32)
    b2 = jax.random.normal(k5, (OUTPUT_LAYER,), dtype=jnp.float32)

    # one predicate span per batch element (start <= end)
    pred_spans = jnp.array([[1, 3], [2, 2]], dtype=jnp.int32)

    # deterministic span-availability matrix: spans with i <= j and width <= 4
    ii = jnp.arange(MAX_LENGTH)[:, None]
    jj = jnp.arange(MAX_LENGTH)[None, :]
    avail_matrix = ((ii <= jj) & ((jj - ii) <= 4)).astype(jnp.int32)

    fwd = jax.jit(bert_classifier_forward)
    out = fwd(hidden_states, pred_spans, avail_matrix, W1, b1, W2, b2)
    out = jax.block_until_ready(out)

    ref = torch_like_reference(hidden_states, pred_spans, avail_matrix,
                               W1, b1, W2, b2)
    np.testing.assert_allclose(np.asarray(out), ref, rtol=1e-4, atol=1e-4)
    assert out.shape == (B, OUTPUT_LAYER, MAX_LENGTH * MAX_LENGTH)

    print("KERNEL_OK")
</pallas_src>

<mosaic_0001>
module attributes {stable_mosaic.version = 11 : i64} {
  func.func @span_head_kernel(%arg0: i32, %arg1: memref<1x32x64xf32, #tpu.memory_space<vmem>>, %arg2: memref<1x32x64xf32, #tpu.memory_space<vmem>>, %arg3: memref<1x1x64xf32, #tpu.memory_space<vmem>>, %arg4: memref<1x64xf32, #tpu.memory_space<vmem>>, %arg5: memref<66x32xf32, #tpu.memory_space<vmem>>, %arg6: memref<66x32xf32, #tpu.memory_space<vmem>>, %arg7: memref<66x1xf32, #tpu.memory_space<vmem>>, %arg8: memref<66x1xf32, #tpu.memory_space<vmem>>, %arg9: memref<5x66xf32, #tpu.memory_space<vmem>>, %arg10: memref<5x1xf32, #tpu.memory_space<vmem>>, %arg11: memref<1x5x64xf32, #tpu.memory_space<vmem>>) attributes {dimension_semantics = [#tpu.dimension_semantics<parallel>], iteration_bounds = array<i64: 2>, scalar_prefetch = 0 : i64, scratch_operands = 0 : i64, tpu.core_type = #tpu.core_type<tc>, window_params = [{transform_indices = @transform_0, window_bounds = array<i64: 1, 32, 64>}, {transform_indices = @transform_1, window_bounds = array<i64: 1, 32, 64>}, {transform_indices = @transform_2, window_bounds = array<i64: 1, 1, 64>}, {pipeline_mode = #tpu.pipeline_mode<synchronous>, transform_indices = @transform_3, window_bounds = array<i64: 1, 64>}, {pipeline_mode = #tpu.pipeline_mode<synchronous>, transform_indices = @transform_4, window_bounds = array<i64: 66, 32>}, {pipeline_mode = #tpu.pipeline_mode<synchronous>, transform_indices = @transform_5, window_bounds = array<i64: 66, 32>}, {pipeline_mode = #tpu.pipeline_mode<synchronous>, transform_indices = @transform_6, window_bounds = array<i64: 66, 1>}, {pipeline_mode = #tpu.pipeline_mode<synchronous>, transform_indices = @transform_7, window_bounds = array<i64: 66, 1>}, {pipeline_mode = #tpu.pipeline_mode<synchronous>, transform_indices = @transform_8, window_bounds = array<i64: 5, 66>}, {pipeline_mode = #tpu.pipeline_mode<synchronous>, transform_indices = @transform_9, window_bounds = array<i64: 5, 1>}, {transform_indices = @transform_10, window_bounds = array<i64: 1, 5, 64>}]} {
    %c0 = arith.constant 0 : index
    %c0_0 = arith.constant 0 : index
    %c0_1 = arith.constant 0 : index
    %0 = vector.load %arg1[%c0, %c0_0, %c0_1] : memref<1x32x64xf32, #tpu.memory_space<vmem>>, vector<1x32x64xf32>
    %1 = vector.shape_cast %0 : vector<1x32x64xf32> to vector<32x64xf32>
    %c0_2 = arith.constant 0 : index
    %c0_3 = arith.constant 0 : index
    %c0_4 = arith.constant 0 : index
    %2 = vector.load %arg2[%c0_2, %c0_3, %c0_4] : memref<1x32x64xf32, #tpu.memory_space<vmem>>, vector<1x32x64xf32>
    %3 = vector.shape_cast %2 : vector<1x32x64xf32> to vector<32x64xf32>
    %c0_5 = arith.constant 0 : index
    %c0_6 = arith.constant 0 : index
    %c0_7 = arith.constant 0 : index
    %4 = vector.load %arg3[%c0_5, %c0_6, %c0_7] : memref<1x1x64xf32, #tpu.memory_space<vmem>>, vector<1x1x64xf32>
    %5 = vector.shape_cast %4 : vector<1x1x64xf32> to vector<1x64xf32>
    %c0_8 = arith.constant 0 : index
    %c0_9 = arith.constant 0 : index
    %6 = vector.load %arg4[%c0_8, %c0_9] : memref<1x64xf32, #tpu.memory_space<vmem>>, vector<1x64xf32>
    %c0_10 = arith.constant 0 : index
    %c0_11 = arith.constant 0 : index
    %7 = vector.load %arg5[%c0_10, %c0_11] : memref<66x32xf32, #tpu.memory_space<vmem>>, vector<66x32xf32>
    %cst = arith.constant dense<0.000000e+00> : vector<66x64xf32>
    %8 = tpu.matmul %7, %1, %cst {dimension_numbers = #tpu.dot_dimension_numbers<[1], [0], [0], [1], [0, 0, 1, 1], [], []>} : vector<66x32xf32>, vector<32x64xf32>, vector<66x64xf32> -> vector<66x64xf32>
    %c0_12 = arith.constant 0 : index
    %c0_13 = arith.constant 0 : index
    %9 = vector.load %arg6[%c0_12, %c0_13] : memref<66x32xf32, #tpu.memory_space<vmem>>, vector<66x32xf32>
    %cst_14 = arith.constant dense<0.000000e+00> : vector<66x64xf32>
    %10 = tpu.matmul %9, %3, %cst_14 {dimension_numbers = #tpu.dot_dimension_numbers<[1], [0], [0], [1], [0, 0, 1, 1], [], []>} : vector<66x32xf32>, vector<32x64xf32>, vector<66x64xf32> -> vector<66x64xf32>
    %11 = arith.addf %8, %10 : vector<66x64xf32>
    %c0_15 = arith.constant 0 : index
    %c0_16 = arith.constant 0 : index
    %12 = vector.load %arg7[%c0_15, %c0_16] : memref<66x1xf32, #tpu.memory_space<vmem>>, vector<66x1xf32>
    %13 = vector.broadcast %12 : vector<66x1xf32> to vector<66x64xf32>
    %14 = vector.broadcast %5 : vector<1x64xf32> to vector<66x64xf32>
    %15 = arith.mulf %13, %14 : vector<66x64xf32>
    %16 = arith.addf %11, %15 : vector<66x64xf32>
    %c0_17 = arith.constant 0 : index
    %c0_18 = arith.constant 0 : index
    %17 = vector.load %arg8[%c0_17, %c0_18] : memref<66x1xf32, #tpu.memory_space<vmem>>, vector<66x1xf32>
    %18 = vector.broadcast %17 : vector<66x1xf32> to vector<66x64xf32>
    %19 = arith.addf %16, %18 : vector<66x64xf32>
    %cst_19 = arith.constant 0.000000e+00 : f32
    %20 = vector.broadcast %cst_19 : f32 to vector<66x64xf32>
    %21 = arith.maximumf %19, %20 : vector<66x64xf32>
    %c0_20 = arith.constant 0 : index
    %c0_21 = arith.constant 0 : index
    %22 = vector.load %arg9[%c0_20, %c0_21] : memref<5x66xf32, #tpu.memory_space<vmem>>, vector<5x66xf32>
    %cst_22 = arith.constant dense<0.000000e+00> : vector<5x64xf32>
    %23 = tpu.matmul %22, %21, %cst_22 {dimension_numbers = #tpu.dot_dimension_numbers<[1], [0], [0], [1], [0, 0, 1, 1], [], []>} : vector<5x66xf32>, vector<66x64xf32>, vector<5x64xf32> -> vector<5x64xf32>
    %c0_23 = arith.constant 0 : index
    %c0_24 = arith.constant 0 : index
    %24 = vector.load %arg10[%c0_23, %c0_24] : memref<5x1xf32, #tpu.memory_space<vmem>>, vector<5x1xf32>
    %25 = vector.broadcast %24 : vector<5x1xf32> to vector<5x64xf32>
    %26 = arith.addf %23, %25 : vector<5x64xf32>
    %27 = vector.broadcast %6 : vector<1x64xf32> to vector<5x64xf32>
    %28 = arith.mulf %26, %27 : vector<5x64xf32>
    %cst_25 = arith.constant dense<0xFF800000> : vector<5xf32>
    %29 = vector.multi_reduction <maximumf>, %28, %cst_25 [1] : vector<5x64xf32> to vector<5xf32>
    %30 = vector.shape_cast %29 : vector<5xf32> to vector<5x1xf32>
    %31 = vector.broadcast %30 : vector<5x1xf32> to vector<5x64xf32>
    %32 = arith.subf %28, %31 : vector<5x64xf32>
    %33 = math.exp %32 : vector<5x64xf32>
    %cst_26 = arith.constant dense<0.000000e+00> : vector<5xf32>
    %34 = vector.multi_reduction <add>, %33, %cst_26 [1] : vector<5x64xf32> to vector<5xf32>
    %35 = vector.shape_cast %34 : vector<5xf32> to vector<5x1xf32>
    %36 = math.log %35 : vector<5x1xf32>
    %37 = arith.addf %30, %36 : vector<5x1xf32>
    %38 = vector.broadcast %37 : vector<5x1xf32> to vector<5x64xf32>
    %39 = arith.subf %28, %38 : vector<5x64xf32>
    %c0_27 = arith.constant 0 : index
    %c0_28 = arith.constant 0 : index
    %c0_29 = arith.constant 0 : index
    %40 = vector.load %arg11[%c0_27, %c0_28, %c0_29] : memref<1x5x64xf32, #tpu.memory_space<vmem>>, vector<1x5x64xf32>
    %41 = vector.shape_cast %40 : vector<1x5x64xf32> to vector<5x64xf32>
    %42 = vector.shape_cast %39 : vector<5x64xf32> to vector<1x5x64xf32>
    tpu.vector_store %arg11[%c0_27, %c0_28, %c0_29], %42 {strides = array<i32>} : memref<1x5x64xf32, #tpu.memory_space<vmem>>, vector<1x5x64xf32>,
    return
  }
  func.func @transform_0(%arg0: i32) -> (i32, i32, i32) {
    %c0_i32 = arith.constant 0 : i32
    %c0_i32_0 = arith.constant 0 : i32
    %c0_i32_1 = arith.constant 0 : i32
    return %arg0, %c0_i32, %c0_i32_0 : i32, i32, i32
  }
  func.func @transform_1(%arg0: i32) -> (i32, i32, i32) {
    %c0_i32 = arith.constant 0 : i32
    %c0_i32_0 = arith.constant 0 : i32
    %c0_i32_1 = arith.constant 0 : i32
    return %arg0, %c0_i32, %c0_i32_0 : i32, i32, i32
  }
  func.func @transform_2(%arg0: i32) -> (i32, i32, i32) {
    %c0_i32 = arith.constant 0 : i32
    %c0_i32_0 = arith.constant 0 : i32
    %c0_i32_1 = arith.constant 0 : i32
    return %arg0, %c0_i32, %c0_i32_0 : i32, i32, i32
  }
  func.func @transform_3(%arg0: i32) -> (i32, i32) {
    %c0_i32 = arith.constant 0 : i32
    %c0_i32_0 = arith.constant 0 : i32
    %c0_i32_1 = arith.constant 0 : i32
    return %c0_i32, %c0_i32_0 : i32, i32
  }
  func.func @transform_4(%arg0: i32) -> (i32, i32) {
    %c0_i32 = arith.constant 0 : i32
    %c0_i32_0 = arith.constant 0 : i32
    %c0_i32_1 = arith.constant 0 : i32
    return %c0_i32, %c0_i32_0 : i32, i32
  }
  func.func @transform_5(%arg0: i32) -> (i32, i32) {
    %c0_i32 = arith.constant 0 : i32
    %c0_i32_0 = arith.constant 0 : i32
    %c0_i32_1 = arith.constant 0 : i32
    return %c0_i32, %c0_i32_0 : i32, i32
  }
  func.func @transform_6(%arg0: i32) -> (i32, i32) {
    %c0_i32 = arith.constant 0 : i32
    %c0_i32_0 = arith.constant 0 : i32
    %c0_i32_1 = arith.constant 0 : i32
    return %c0_i32, %c0_i32_0 : i32, i32
  }
  func.func @transform_7(%arg0: i32) -> (i32, i32) {
    %c0_i32 = arith.constant 0 : i32
    %c0_i32_0 = arith.constant 0 : i32
    %c0_i32_1 = arith.constant 0 : i32
    return %c0_i32, %c0_i32_0 : i32, i32
  }
  func.func @transform_8(%arg0: i32) -> (i32, i32) {
    %c0_i32 = arith.constant 0 : i32
    %c0_i32_0 = arith.constant 0 : i32
    %c0_i32_1 = arith.constant 0 : i32
    return %c0_i32, %c0_i32_0 : i32, i32
  }
  func.func @transform_9(%arg0: i32) -> (i32, i32) {
    %c0_i32 = arith.constant 0 : i32
    %c0_i32_0 = arith.constant 0 : i32
    %c0_i32_1 = arith.constant 0 : i32
    return %c0_i32, %c0_i32_0 : i32, i32
  }
  func.func @transform_10(%arg0: i32) -> (i32, i32, i32) {
    %c0_i32 = arith.constant 0 : i32
    %c0_i32_0 = arith.constant 0 : i32
    %c0_i32_1 = arith.constant 0 : i32
    return %arg0, %c0_i32, %c0_i32_0 : i32, i32, i32
  }
}

</mosaic_0001>

<llo_original>
// kernel: le.8
$region0: #{le.8}
  #allocation0 [shape = 's32[1]{0}', space=sflag, size = 0x4, scoped, tag = 'scoped memory for le.8']
  %s0 = inlined_call_operand.vmem [shape: s32[64], index: 0, kind: input, shape index: {}]
  %s1 = inlined_call_operand.vmem [shape: s32[64], index: 1, kind: input, shape index: {}]
  %s2 = inlined_call_operand.vmem [shape: pred[64], index: 2, kind: output, shape index: {}]
  %v3 = vld [vmem:[%s0] sm:$0x1]
  %v4 = vld [vmem:[%s1] sm:$0x1]
  %5 = xla_tuple %v3, %v4
  %6 = xla_tuple %5
  %vm7 = vcmp.le.s32.totalorder %v3, %v4
  %v8 = vsel %vm7, 1, 0
  %9 = xla_tuple %v8
  %v10 = vpack.c.b16 0, %v8
  %v11 = vpack.c.b8 0, %v10
  %13 = vst [vmem:[%s2] sm:$0x1] %v11

// kernel: bert_classifier_forward.1
$region0: #{bert_classifier_forward.1}
  #allocation0 [shape = 'u32[]', space=smem, size = 0x4, offset = 0x4, fixed_abs, tag = 'smem constant byte address 0x4 - core index']
  #allocation1 [shape = 'u32[144,128]{1,0:T(1,128)}', space=vmem, size = 0x12000, scoped, tag = 'internal scratch']
  %s0 = inlined_call_operand.vmem [shape: f32[2,32,64], index: 0, kind: input, shape index: {}]
  %s1 = inlined_call_operand.vmem [shape: f32[2,32,64], index: 1, kind: input, shape index: {}]
  %s2 = inlined_call_operand.vmem [shape: f32[2,1,64], index: 2, kind: input, shape index: {}]
  %s3 = inlined_call_operand.vmem [shape: f32[1,64], index: 3, kind: input, shape index: {}]
  %s4 = inlined_call_operand.vmem [shape: f32[66,32], index: 4, kind: input, shape index: {}]
  %s5 = inlined_call_operand.vmem [shape: f32[66,32], index: 5, kind: input, shape index: {}]
  %s6 = inlined_call_operand.vmem [shape: f32[66,1], index: 6, kind: input, shape index: {}]
  %s7 = inlined_call_operand.vmem [shape: f32[66,1], index: 7, kind: input, shape index: {}]
  %s8 = inlined_call_operand.vmem [shape: f32[5,66], index: 8, kind: input, shape index: {}]
  %s9 = inlined_call_operand.vmem [shape: f32[5,1], index: 9, kind: input, shape index: {}]
  %s10 = inlined_call_operand.vmem [shape: f32[2,5,64], index: 10, kind: output, shape index: {}]
  %s11 = sld [smem:[#allocation0]]
  $region73: #{bert_classifier_forward.1} parent=0
    _
  %s13 = ssub.s32 1, %s11
  %s14 = scalar_select 0, %s13, %s11
  loop: start=0, step=1, limit=4
  $region2: #{bert_classifier_forward.1} parent=0 // loop_pre_header
    _
  $region3: #{bert_classifier_forward.1} parent=0 // loop_header
    %s16 = sphi 0, %s20
    %p17 = scmp.ge.s32.totalorder %s16, 4
    %s26 = sphi 0, %s28
    %s29 = sphi 0, %s26
    %s30 = sphi 0, %s29
    %s46 = sphi 0, %s30
    %s52 = sphi 0, %s54
    %s55 = sphi 0, %s52
    %s56 = sphi 0, %s55
    %s72 = sphi 0, %s56
    %s78 = sphi 0, %s80
    %s81 = sphi 0, %s78
    %s82 = sphi 0, %s81
    %s98 = sphi 0, %s82
    %s102 = sphi 0, %s102
    %s104 = sphi 0, %s102
    %s105 = sphi 0, %s104
    %s119 = sphi 0, %s105
    %s123 = sphi 0, %s123
    %s125 = sphi 0, %s123
    %s126 = sphi 0, %s125
    %s140 = sphi 0, %s126
    %s144 = sphi 0, %s144
    %s146 = sphi 0, %s144
    %s147 = sphi 0, %s146
    %s161 = sphi 0, %s147
    %s165 = sphi 0, %s165
    %s167 = sphi 0, %s165
    %s168 = sphi 0, %s167
    %s182 = sphi 0, %s168
    %s186 = sphi 0, %s186
    %s188 = sphi 0, %s186
    %s189 = sphi 0, %s188
    %s203 = sphi 0, %s189
    %s207 = sphi 0, %s207
    %s209 = sphi 0, %s207
    %s210 = sphi 0, %s209
    %s224 = sphi 0, %s210
    %s228 = sphi 0, %s228
    %s230 = sphi 0, %s228
    %s231 = sphi 0, %s230
    %s245 = sphi 0, %s231
    %s251 = sphi 0, %s253
    %s254 = sphi 0, %s251
    %s255 = sphi 0, %s254
    %s271 = sphi 0, %s255
  $region4: #{bert_classifier_forward.1} parent=0 // loop_header_branch
    %19 = sbr.rel (%p17) target = $region8
  $region5: #{bert_classifier_forward.1} parent=0 // loop_body
    %s21 = ssub.s32 %s16, 1
    %s22 = ssub.s32 %s16, 2
    %s23 = sadd.s32 %s16, 1
    %s24 = ssub.s32 %s16, %s23
    %p25 = scmp.eq.s32.totalorder %s24, 0
    %s27 = sadd.s32 %s26, 1
    %s28 = scalar_select %p25, %s26, %s27
    %p31 = pneg %p25
    %p32 = scmp.eq.s32.totalorder %s16, 1
    %p33 = por %p31, %p32
    %p34 = scmp.ne.s32.totalorder %s26, %s29
    %p35 = scmp.eq.s32.totalorder %s16, 0
    %p36 = por %p34, %p35
    %p37 = scmp.ne.s32.totalorder %s26, %s29
    %p38 = scmp.eq.s32.totalorder %s21, 1
    %p39 = por %p37, %p38
    %p40 = scmp.ne.s32.totalorder %s29, %s30
    %p41 = scmp.eq.s32.totalorder %s21, 0
    %p42 = por %p40, %p41
    %p43 = scmp.ne.s32.totalorder %s29, %s30
    %p44 = scmp.eq.s32.totalorder %s22, 1
    %p45 = por %p43, %p44
    %p47 = scmp.ne.s32.totalorder %s30, %s46
    %p48 = scmp.eq.s32.totalorder %s22, 0
    %p49 = por %p47, %p48
    %s50 = ssub.s32 %s16, %s23
    %p51 = scmp.eq.s32.totalorder %s50, 0
    %s53 = sadd.s32 %s52, 1
    %s54 = scalar_select %p51, %s52, %s53
    %p57 = pneg %p51
    %p58 = scmp.eq.s32.totalorder %s16, 1
    %p59 = por %p57, %p58
    %p60 = scmp.ne.s32.totalorder %s52, %s55
    %p61 = scmp.eq.s32.totalorder %s16, 0
    %p62 = por %p60, %p61
    %p63 = scmp.ne.s32.totalorder %s52, %s55
    %p64 = scmp.eq.s32.totalorder %s21, 1
    %p65 = por %p63, %p64
    %p66 = scmp.ne.s32.totalorder %s55, %s56
    %p67 = scmp.eq.s32.totalorder %s21, 0
    %p68 = por %p66, %p67
    %p69 = scmp.ne.s32.totalorder %s55, %s56
    %p70 = scmp.eq.s32.totalorder %s22, 1
    %p71 = por %p69, %p70
    %p73 = scmp.ne.s32.totalorder %s56, %s72
    %p74 = scmp.eq.s32.totalorder %s22, 0
    %p75 = por %p73, %p74
    %s76 = ssub.s32 %s16, %s23
    %p77 = scmp.eq.s32.totalorder %s76, 0
    %s79 = sadd.s32 %s78, 1
    %s80 = scalar_select %p77, %s78, %s79
    %p83 = pneg %p77
    %p84 = scmp.eq.s32.totalorder %s16, 1
    %p85 = por %p83, %p84
    %p86 = scmp.ne.s32.totalorder %s78, %s81
    %p87 = scmp.eq.s32.totalorder %s16, 0
    %p88 = por %p86, %p87
    %p89 = scmp.ne.s32.totalorder %s78, %s81
    %p90 = scmp.eq.s32.totalorder %s21, 1
    %p91 = por %p89, %p90
    %p92 = scmp.ne.s32.totalorder %s81, %s82
    %p93 = scmp.eq.s32.totalorder %s21, 0
    %p94 = por %p92, %p93
    %p95 = scmp.ne.s32.totalorder %s81, %s82
    %p96 = scmp.eq.s32.totalorder %s22, 1
    %p97 = por %p95, %p96
    %p99 = scmp.ne.s32.totalorder %s82, %s98
    %p100 = scmp.eq.s32.totalorder %s22, 0
    %p101 = por %p99, %p100
    %s103 = sadd.s32 %s102, 1
    %p106 = scmp.eq.s32.totalorder %s16, 1
    %p107 = scmp.ne.s32.totalorder %s102, %s104
    %p108 = scmp.eq.s32.totalorder %s16, 0
    %p109 = por %p107, %p108
    %p110 = scmp.ne.s32.totalorder %s102, %s104
    %p111 = scmp.eq.s32.totalorder %s21, 1
    %p112 = por %p110, %p111
    %p113 = scmp.ne.s32.totalorder %s104, %s105
    %p114 = scmp.eq.s32.totalorder %s21, 0
    %p115 = por %p113, %p114
    %p116 = scmp.ne.s32.totalorder %s104, %s105
    %p117 = scmp.eq.s32.totalorder %s22, 1
    %p118 = por %p116, %p117
    %p120 = scmp.ne.s32.totalorder %s105, %s119
    %p121 = scmp.eq.s32.totalorder %s22, 0
    %p122 = por %p120, %p121
    %s124 = sadd.s32 %s123, 1
    %p127 = scmp.eq.s32.totalorder %s16, 1
    %p128 = scmp.ne.s32.totalorder %s123, %s125
    %p129 = scmp.eq.s32.totalorder %s16, 0
    %p130 = por %p128, %p129
    %p131 = scmp.ne.s32.totalorder %s123, %s125
    %p132 = scmp.eq.s32.totalorder %s21, 1
    %p133 = por %p131, %p132
    %p134 = scmp.ne.s32.totalorder %s125, %s126
    %p135 = scmp.eq.s32.totalorder %s21, 0
    %p136 = por %p134, %p135
    %p137 = scmp.ne.s32.totalorder %s125, %s126
    %p138 = scmp.eq.s32.totalorder %s22, 1
    %p139 = por %p137, %p138
    %p141 = scmp.ne.s32.totalorder %s126, %s140
    %p142 = scmp.eq.s32.totalorder %s22, 0
    %p143 = por %p141, %p142
    %s145 = sadd.s32 %s144, 1
    %p148 = scmp.eq.s32.totalorder %s16, 1
    %p149 = scmp.ne.s32.totalorder %s144, %s146
    %p150 = scmp.eq.s32.totalorder %s16, 0
    %p151 = por %p149, %p150
    %p152 = scmp.ne.s32.totalorder %s144, %s146
    %p153 = scmp.eq.s32.totalorder %s21, 1
    %p154 = por %p152, %p153
    %p155 = scmp.ne.s32.totalorder %s146, %s147
    %p156 = scmp.eq.s32.totalorder %s21, 0
    %p157 = por %p155, %p156
    %p158 = scmp.ne.s32.totalorder %s146, %s147
    %p159 = scmp.eq.s32.totalorder %s22, 1
    %p160 = por %p158, %p159
    %p162 = scmp.ne.s32.totalorder %s147, %s161
    %p163 = scmp.eq.s32.totalorder %s22, 0
    %p164 = por %p162, %p163
    %s166 = sadd.s32 %s165, 1
    %p169 = scmp.eq.s32.totalorder %s16, 1
    %p170 = scmp.ne.s32.totalorder %s165, %s167
    %p171 = scmp.eq.s32.totalorder %s16, 0
    %p172 = por %p170, %p171
    %p173 = scmp.ne.s32.totalorder %s165, %s167
    %p174 = scmp.eq.s32.totalorder %s21, 1
    %p175 = por %p173, %p174
    %p176 = scmp.ne.s32.totalorder %s167, %s168
    %p177 = scmp.eq.s32.totalorder %s21, 0
    %p178 = por %p176, %p177
    %p179 = scmp.ne.s32.totalorder %s167, %s168
    %p180 = scmp.eq.s32.totalorder %s22, 1
    %p181 = por %p179, %p180
    %p183 = scmp.ne.s32.totalorder %s168, %s182
    %p184 = scmp.eq.s32.totalorder %s22, 0
    %p185 = por %p183, %p184
    %s187 = sadd.s32 %s186, 1
    %p190 = scmp.eq.s32.totalorder %s16, 1
    %p191 = scmp.ne.s32.totalorder %s186, %s188
    %p192 = scmp.eq.s32.totalorder %s16, 0
    %p193 = por %p191, %p192
    %p194 = scmp.ne.s32.totalorder %s186, %s188
    %p195 = scmp.eq.s32.totalorder %s21, 1
    %p196 = por %p194, %p195
    %p197 = scmp.ne.s32.totalorder %s188, %s189
    %p198 = scmp.eq.s32.totalorder %s21, 0
    %p199 = por %p197, %p198
    %p200 = scmp.ne.s32.totalorder %s188, %s189
    %p201 = scmp.eq.s32.totalorder %s22, 1
    %p202 = por %p200, %p201
    %p204 = scmp.ne.s32.totalorder %s189, %s203
    %p205 = scmp.eq.s32.totalorder %s22, 0
    %p206 = por %p204, %p205
    %s208 = sadd.s32 %s207, 1
    %p211 = scmp.eq.s32.totalorder %s16, 1
    %p212 = scmp.ne.s32.totalorder %s207, %s209
    %p213 = scmp.eq.s32.totalorder %s16, 0
    %p214 = por %p212, %p213
    %p215 = scmp.ne.s32.totalorder %s207, %s209
    %p216 = scmp.eq.s32.totalorder %s21, 1
    %p217 = por %p215, %p216
    %p218 = scmp.ne.s32.totalorder %s209, %s210
    %p219 = scmp.eq.s32.totalorder %s21, 0
    %p220 = por %p218, %p219
    %p221 = scmp.ne.s32.totalorder %s209, %s210
    %p222 = scmp.eq.s32.totalorder %s22, 1
    %p223 = por %p221, %p222
    %p225 = scmp.ne.s32.totalorder %s210, %s224
    %p226 = scmp.eq.s32.totalorder %s22, 0
    %p227 = por %p225, %p226
    %s229 = sadd.s32 %s228, 1
    %p232 = scmp.eq.s32.totalorder %s16, 1
    %p233 = scmp.ne.s32.totalorder %s228, %s230
    %p234 = scmp.eq.s32.totalorder %s16, 0
    %p235 = por %p233, %p234
    %p236 = scmp.ne.s32.totalorder %s228, %s230
    %p237 = scmp.eq.s32.totalorder %s21, 1
    %p238 = por %p236, %p237
    %p239 = scmp.ne.s32.totalorder %s230, %s231
    %p240 = scmp.eq.s32.totalorder %s21, 0
    %p241 = por %p239, %p240
    %p242 = scmp.ne.s32.totalorder %s230, %s231
    %p243 = scmp.eq.s32.totalorder %s22, 1
    %p244 = por %p242, %p243
    %p246 = scmp.ne.s32.totalorder %s231, %s245
    %p247 = scmp.eq.s32.totalorder %s22, 0
    %p248 = por %p246, %p247
    %s249 = ssub.s32 %s16, %s23
    %p250 = scmp.eq.s32.totalorder %s249, 0
    %s252 = sadd.s32 %s251, 1
    %s253 = scalar_select %p250, %s251, %s252
    %p256 = pneg %p250
    %p257 = scmp.eq.s32.totalorder %s16, 1
    %p258 = por %p256, %p257
    %p259 = scmp.ne.s32.totalorder %s251, %s254
    %p260 = scmp.eq.s32.totalorder %s16, 0
    %p261 = por %p259, %p260
    %p262 = scmp.ne.s32.totalorder %s251, %s254
    %p263 = scmp.eq.s32.totalorder %s21, 1
    %p264 = por %p262, %p263
    %p265 = scmp.ne.s32.totalorder %s254, %s255
    %p266 = scmp.eq.s32.totalorder %s21, 0
    %p267 = por %p265, %p266
    %p268 = scmp.ne.s32.totalorder %s254, %s255
    %p269 = scmp.eq.s32.totalorder %s22, 1
    %p270 = por %p268, %p269
    %p272 = scmp.ne.s32.totalorder %s255, %s271
    %p273 = scmp.eq.s32.totalorder %s22, 0
    %p274 = por %p272, %p273
    %p275 = scmp.le.s32.totalorder 1, %s16
    %p276 = scmp.lt.s32.totalorder %s16, 3
    %p277 = pnand %p275, %p276
    %p278 = pneg %p277
    // Predicated region
    $region9: #{bert_classifier_forward.1} parent=5 // pred_check
      _
    $region10: #{bert_classifier_forward.1} parent=5 // pred_check_branch
      %280 = sbr.rel (%p277) target = $region12
    $region11: #{bert_classifier_forward.1} parent=5 // pred_region
      %s281 = ssub.s32 %s16, 1
      // Predicated region
      $region13: #{bert_classifier_forward.1} parent=11 // pred_check
        %p282 = pneg %p115
      $region14: #{bert_classifier_forward.1} parent=11 // pred_check_branch
        %284 = sbr.rel (%p282) target = $region16
      $region15: #{bert_classifier_forward.1} parent=11 // pred_region
        _
      $region16: #{bert_classifier_forward.1} parent=11 // pred_fallthru
        _
      // Predicated region
      $region17: #{bert_classifier_forward.1} parent=11 // pred_check
        %p285 = pneg %p136
      $region18: #{bert_classifier_forward.1} parent=11 // pred_check_branch
        %287 = sbr.rel (%p285) target = $region20
      $region19: #{bert_classifier_forward.1} parent=11 // pred_region
        _
      $region20: #{bert_classifier_forward.1} parent=11 // pred_fallthru
        _
      // Predicated region
      $region21: #{bert_classifier_forward.1} parent=11 // pred_check
        %p288 = pneg %p157
      $region22: #{bert_classifier_forward.1} parent=11 // pred_check_branch
        %290 = sbr.rel (%p288) target = $region24
      $region23: #{bert_classifier_forward.1} parent=11 // pred_region
        _
      $region24: #{bert_classifier_forward.1} parent=11 // pred_fallthru
        _
      // Predicated region
      $region25: #{bert_classifier_forward.1} parent=11 // pred_check
        %p291 = pneg %p178
      $region26: #{bert_classifier_forward.1} parent=11 // pred_check_branch
        %293 = sbr.rel (%p291) target = $region28
      $region27: #{bert_classifier_forward.1} parent=11 // pred_region
        _
      $region28: #{bert_classifier_forward.1} parent=11 // pred_fallthru
        _
      // Predicated region
      $region29: #{bert_classifier_forward.1} parent=11 // pred_check
        %p294 = pneg %p199
      $region30: #{bert_classifier_forward.1} parent=11 // pred_check_branch
        %296 = sbr.rel (%p294) target = $region32
      $region31: #{bert_classifier_forward.1} parent=11 // pred_region
        _
      $region32: #{bert_classifier_forward.1} parent=11 // pred_fallthru
        _
      // Predicated region
      $region33: #{bert_classifier_forward.1} parent=11 // pred_check
        %p297 = pneg %p220
      $region34: #{bert_classifier_forward.1} parent=11 // pred_check_branch
        %299 = sbr.rel (%p297) target = $region36
      $region35: #{bert_classifier_forward.1} parent=11 // pred_region
        _
      $region36: #{bert_classifier_forward.1} parent=11 // pred_fallthru
        _
      // Predicated region
      $region37: #{bert_classifier_forward.1} parent=11 // pred_check
        %p300 = pneg %p241
      $region38: #{bert_classifier_forward.1} parent=11 // pred_check_branch
        %302 = sbr.rel (%p300) target = $region40
      $region39: #{bert_classifier_forward.1} parent=11 // pred_region
        _
      $region40: #{bert_classifier_forward.1} parent=11 // pred_fallthru
        _
    $region12: #{bert_classifier_forward.1} parent=5 // pred_fallthru
      _
    %p303 = scmp.lt.s32.totalorder %s16, 2
    // Predicated region
    $region41: #{bert_classifier_forward.1} parent=5 // pred_check
      %p304 = pneg %p303
    $region42: #{bert_classifier_forward.1} parent=5 // pred_check_branch
      %306 = sbr.rel (%p304) target = $region44
    $region43: #{bert_classifier_forward.1} parent=5 // pred_region
      // Predicated region
      $region45: #{bert_classifier_forward.1} parent=43 // pred_check
        %p307 = pneg %p36
      $region46: #{bert_classifier_forward.1} parent=43 // pred_check_branch
        %309 = sbr.rel (%p307) target = $region48
      $region47: #{bert_classifier_forward.1} parent=43 // pred_region
        %p310 = scmp.lt.s32.totalorder %s16, 1
        %s311 = scalar_select %p310, %s16, 1
        %s312 = smul.addr %s311, 4
        %s313 = smul.addr %s312, 8
        %s314 = scalar_lea.vmem %s0, %s313
      $region48: #{bert_classifier_forward.1} parent=43 // pred_fallthru
        _
      // Predicated region
      $region49: #{bert_classifier_forward.1} parent=43 // pred_check
        %p315 = pneg %p62
      $region50: #{bert_classifier_forward.1} parent=43 // pred_check_branch
        %317 = sbr.rel (%p315) target = $region52
      $region51: #{bert_classifier_forward.1} parent=43 // pred_region
        %p318 = scmp.lt.s32.totalorder %s16, 1
        %s319 = scalar_select %p318, %s16, 1
        %s320 = smul.addr %s319, 4
        %s321 = smul.addr %s320, 8
        %s322 = scalar_lea.vmem %s1, %s321
      $region52: #{bert_classifier_forward.1} parent=43 // pred_fallthru
        _
      // Predicated region
      $region53: #{bert_classifier_forward.1} parent=43 // pred_check
        %p323 = pneg %p88
      $region54: #{bert_classifier_forward.1} parent=43 // pred_check_branch
        %325 = sbr.rel (%p323) target = $region56
      $region55: #{bert_classifier_forward.1} parent=43 // pred_region
        %p326 = scmp.lt.s32.totalorder %s16, 1
        %s327 = scalar_select %p326, %s16, 1
        %s328 = scalar_lea.vmem %s2, %s327
      $region56: #{bert_classifier_forward.1} parent=43 // pred_fallthru
        _
    $region44: #{bert_classifier_forward.1} parent=5 // pred_fallthru
      _
    %p329 = scmp.le.s32.totalorder 1, %s16
    %p330 = scmp.lt.s32.totalorder %s16, 3
    %p331 = pnand %p329, %p330
    %p332 = pneg %p331
    // Predicated region
    $region57: #{bert_classifier_forward.1} parent=5 // pred_check
      _
    $region58: #{bert_classifier_forward.1} parent=5 // pred_check_branch
      %334 = sbr.rel (%p331) target = $region60
    $region59: #{bert_classifier_forward.1} parent=5 // pred_region
      %s335 = ssub.s32 %s16, 1
      %p336 = scmp.lt.s32.totalorder %s21, 1
      %s337 = scalar_select %p336, %s21, 1
      %s338 = smul.addr %s337, 4
      %s339 = smul.addr %s338, 8
      %s340 = scalar_lea.vmem %s0, %s339
      %p341 = pneg %p42
      %p342 = pneg %p39
      %p343 = scmp.lt.s32.totalorder %s21, 1
      %s344 = scalar_select %p343, %s21, 1
      %s345 = smul.addr %s344, 4
      %s346 = smul.addr %s345, 8
      %s347 = scalar_lea.vmem %s1, %s346
      %p348 = pneg %p68
      %p349 = pneg %p65
      %p350 = scmp.lt.s32.totalorder %s21, 1
      %s351 = scalar_select %p350, %s21, 1
      %s352 = scalar_lea.vmem %s2, %s351
      %p353 = pneg %p94
      %p354 = pneg %p91
      %p355 = pneg %p115
      %p356 = pneg %p112
      %p357 = pneg %p136
      %p358 = pneg %p133
      %p359 = pneg %p157
      %p360 = pneg %p154
      %p361 = pneg %p178
      %p362 = pneg %p175
      %p363 = pneg %p199
      %p364 = pneg %p196
      %p365 = pneg %p220
      %p366 = pneg %p217
      %p367 = pneg %p241
      %p368 = pneg %p238
      %p369 = pneg %p267
      %p370 = pneg %p264
      %p371 = scmp.lt.s32.totalorder %s21, 1
      %s372 = scalar_select %p371, %s21, 1
      %s373 = smul.addr %s372, 8
      %s374 = scalar_lea.vmem %s10, %s373
      %p375 = scmp.lt.s32.totalorder %s21, 1
      %s376 = scalar_select %p375, %s21, 1
      %s377 = smul.addr %s376, 4
      %s378 = smul.addr %s377, 8
      %s379 = scalar_lea.vmem %s0, %s378
      %p380 = scmp.lt.s32.totalorder %s21, 1
      %s381 = scalar_select %p380, %s21, 1
      %s382 = smul.addr %s381, 4
      %s383 = smul.addr %s382, 8
      %s384 = scalar_lea.vmem %s1, %s383
      %p385 = scmp.lt.s32.totalorder %s21, 1
      %s386 = scalar_select %p385, %s21, 1
      %s387 = scalar_lea.vmem %s2, %s386
      %p388 = scmp.lt.s32.totalorder %s21, 1
      %s389 = scalar_select %p388, %s21, 1
      %s390 = smul.addr %s389, 8
      %s391 = scalar_lea.vmem %s10, %s390
      %v392 = vld [vmem:[%s379] sm:$0xff]
      %v393 = vld [vmem:[%s379 + $0x8] sm:$0xff]
      %v394 = vld [vmem:[%s379 + $0x10] sm:$0xff]
      %v395 = vld [vmem:[%s379 + $0x18] sm:$0xff]
      %v396 = vld [vmem:[%s384] sm:$0xff]
      %v397 = vld [vmem:[%s384 + $0x8] sm:$0xff]
      %v398 = vld [vmem:[%s384 + $0x10] sm:$0xff]
      %v399 = vld [vmem:[%s384 + $0x18] sm:$0xff]
      %v400 = vld [vmem:[%s387] sm:$0x1]
      %v401 = vld [vmem:[%s3] sm:$0x1]
      %v402 = vld [vmem:[%s4] sm:$0xff]
      %v403 = vld [vmem:[%s4 + $0x8] sm:$0xff]
      %v404 = vld [vmem:[%s4 + $0x10] sm:$0xff]
      %v405 = vld [vmem:[%s4 + $0x18] sm:$0xff]
      %v406 = vld [vmem:[%s4 + $0x20] sm:$0xff]
      %v407 = vld [vmem:[%s4 + $0x28] sm:$0xff]
      %v408 = vld [vmem:[%s4 + $0x30] sm:$0xff]
      %v409 = vld [vmem:[%s4 + $0x38] sm:$0xff]
      %v410 = vld [vmem:[%s4 + $0x40] sm:$0x3]
      %v411 = vld [vmem:[%s5] sm:$0xff]
      %v412 = vld [vmem:[%s5 + $0x8] sm:$0xff]
      %v413 = vld [vmem:[%s5 + $0x10] sm:$0xff]
      %v414 = vld [vmem:[%s5 + $0x18] sm:$0xff]
      %v415 = vld [vmem:[%s5 + $0x20] sm:$0xff]
      %v416 = vld [vmem:[%s5 + $0x28] sm:$0xff]
      %v417 = vld [vmem:[%s5 + $0x30] sm:$0xff]
      %v418 = vld [vmem:[%s5 + $0x38] sm:$0xff]
      %v419 = vld [vmem:[%s5 + $0x40] sm:$0x3]
      %vm420 = vcmask 261120
      %v422 = vsel %vm420, %v411, 0
      %v425 = vsel %vm420, %v412, 0
      %v428 = vsel %vm420, %v413, 0
      %v431 = vsel %vm420, %v414, 0
      %v434 = vsel %vm420, %v415, 0
      %v437 = vsel %vm420, %v416, 0
      %v440 = vsel %vm420, %v417, 0
      %v443 = vsel %vm420, %v418, 0
      %v446 = vsel %vm420, %v419, 0
      %448 = vmatprep.subr.mxu0 0.0
      %449 = vmatpush1.msra.mxu0 %v396
      %450 = vmatprep.subr.mxu0 0.0
      %451 = vmatpush1.msra.mxu0 %v397
      %452 = vmatprep.subr.mxu0 0.0
      %453 = vmatpush1.msra.mxu0 %v398
      %454 = vmatprep.subr.mxu0 0.0
      %455 = vmatpush1.msra.mxu0 %v399
      %456 = vmatprep.subr.mxu0 0.0
      %457 = vmatpush1.msra.mxu0 0.0
      %458 = vmatprep.subr.mxu0 0.0
      %459 = vmatpush1.msra.mxu0 0.0
      %460 = vmatprep.subr.mxu0 0.0
      %461 = vmatpush1.msra.mxu0 0.0
      %462 = vmatprep.subr.mxu0 0.0
      %463 = vmatpush1.msra.mxu0 0.0
      %464 = vmatprep.subr.mxu0 0.0
      %465 = vmatpush1.msra.mxu0 0.0
      %466 = vmatprep.subr.mxu0 0.0
      %467 = vmatpush1.msra.mxu0 0.0
      %468 = vmatprep.subr.mxu0 0.0
      %469 = vmatpush1.msra.mxu0 0.0
      %470 = vmatprep.subr.mxu0 0.0
      %471 = vmatpush1.msra.mxu0 0.0
      %472 = vmatprep.subr.mxu0 0.0
      %473 = vmatpush1.msra.mxu0 0.0
      %474 = vmatprep.subr.mxu0 0.0
      %475 = vmatpush1.msra.mxu0 0.0
      %476 = vmatprep.subr.mxu0 0.0
      %477 = vmatpush1.msra.mxu0 0.0
      %478 = vmatprep.subr.mxu0 0.0
      %479 = vmatpush1.msra.mxu0 0.0
      %480 = vmatprep.subr.mxu0 0.0
      %481 = vmatpush1.msra.mxu0 0.0
      %482 = vmatprep.subr.mxu0 0.0
      %483 = vmatpush1.msra.mxu0 0.0
      %484 = vmatprep.subr.mxu0 0.0
      %485 = vmatpush1.msra.mxu0 0.0
      %486 = vmatprep.subr.mxu0 0.0
      %487 = vmatpush1.msra.mxu0 0.0
      %488 = vmatprep.subr.mxu0 0.0
      %489 = vmatpush1.msra.mxu0 0.0
      %490 = vmatprep.subr.mxu0 0.0
      %491 = vmatpush1.msra.mxu0 0.0
      %492 = vmatprep.subr.mxu0 0.0
      %493 = vmatpush1.msra.mxu0 0.0
      %494 = vmatprep.subr.mxu0 0.0
      %495 = vmatpush1.msra.mxu0 0.0
      %496 = vmatprep.subr.mxu0 0.0
      %497 = vmatpush1.msra.mxu0 0.0
      %498 = vmatprep.subr.mxu0 0.0
      %499 = vmatpush1.msra.mxu0 0.0
      %500 = vmatprep.subr.mxu0 0.0
      %501 = vmatpush1.msra.mxu0 0.0
      %502 = vmatprep.subr.mxu0 0.0
      %503 = vmatpush1.msra.mxu0 0.0
      %504 = vmatprep.subr.mxu0 0.0
      %505 = vmatpush1.msra.mxu0 0.0
      %506 = vmatprep.subr.mxu0 0.0
      %507 = vmatpush1.msra.mxu0 0.0
      %508 = vmatprep.subr.mxu0 0.0
      %509 = vmatpush1.msra.mxu0 0.0
      %510 = vmatprep.subr.mxu0 0.0
      %511 = vmatpush1.msra.mxu0 0.0
      %512 = vmatprep.mubr.f32.mxu0 0.0
      %513 = vmatmul.mubr.f32.gmra.mrb[0].mxu0 %v422
      %v514 = vpop.f32.mrb[0].mxu0
      %v515 = vadd.f32 0.0, %v514
      %v516 = vpop.f32.mrb[0].mxu0
      %517 = vmatprep.mubr.f32.mxu0 0.0
      %518 = vmatmul.mubr.f32.gmra.mrb[0].mxu0 %v425
      %v519 = vpop.f32.mrb[0].mxu0
      %v520 = vadd.f32 0.0, %v519
      %v521 = vpop.f32.mrb[0].mxu0
      %522 = vmatprep.mubr.f32.mxu0 0.0
      %523 = vmatmul.mubr.f32.gmra.mrb[0].mxu0 %v428
      %v524 = vpop.f32.mrb[0].mxu0
      %v525 = vadd.f32 0.0, %v524
      %v526 = vpop.f32.mrb[0].mxu0
      %527 = vmatprep.mubr.f32.mxu0 0.0
      %528 = vmatmul.mubr.f32.gmra.mrb[0].mxu0 %v431
      %v529 = vpop.f32.mrb[0].mxu0
      %v530 = vadd.f32 0.0, %v529
      %v531 = vpop.f32.mrb[0].mxu0
      %532 = vmatprep.mubr.f32.mxu0 0.0
      %533 = vmatmul.mubr.f32.gmra.mrb[0].mxu0 %v434
      %v534 = vpop.f32.mrb[0].mxu0
      %v535 = vadd.f32 0.0, %v534
      %v536 = vpop.f32.mrb[0].mxu0
      %537 = vmatprep.mubr.f32.mxu0 0.0
      %538 = vmatmul.mubr.f32.gmra.mrb[0].mxu0 %v437
      %v539 = vpop.f32.mrb[0].mxu0
      %v540 = vadd.f32 0.0, %v539
      %v541 = vpop.f32.mrb[0].mxu0
      %542 = vmatprep.mubr.f32.mxu0 0.0
      %543 = vmatmul.mubr.f32.gmra.mrb[0].mxu0 %v440
      %v544 = vpop.f32.mrb[0].mxu0
      %v545 = vadd.f32 0.0, %v544
      %v546 = vpop.f32.mrb[0].mxu0
      %547 = vmatprep.mubr.f32.mxu0 0.0
      %548 = vmatmul.mubr.f32.gmra.mrb[0].mxu0 %v443
      %v549 = vpop.f32.mrb[0].mxu0
      %v550 = vadd.f32 0.0, %v549
      %v551 = vpop.f32.mrb[0].mxu0
      %552 = vmatprep.mubr.f32.mxu0 0.0
      %553 = vmatmul.mubr.f32.gmra.mrb[0].mxu0 %v446
      %v554 = vpop.f32.mrb[0].mxu0
      %v555 = vadd.f32 0.0, %v554
      %v556 = vpop.f32.mrb[0].mxu0
      %557 = vdwg.mxu0
      %v559 = vsel %vm420, %v402, 0
      %v562 = vsel %vm420, %v403, 0
      %v565 = vsel %vm420, %v404, 0
      %v568 = vsel %vm420, %v405, 0
      %v571 = vsel %vm420, %v406, 0
      %v574 = vsel %vm420, %v407, 0
      %v577 = vsel %vm420, %v408, 0
      %v580 = vsel %vm420, %v409, 0
      %v583 = vsel %vm420, %v410, 0
      %585 = vmatprep.subr.mxu0 0.0
      %586 = vmatpush1.msra.mxu0 %v392
      %587 = vmatprep.subr.mxu0 0.0
      %588 = vmatpush1.msra.mxu0 %v393
      %589 = vmatprep.subr.mxu0 0.0
      %590 = vmatpush1.msra.mxu0 %v394
      %591 = vmatprep.subr.mxu0 0.0
      %592 = vmatpush1.msra.mxu0 %v395
      %593 = vmatprep.subr.mxu0 0.0
      %594 = vmatpush1.msra.mxu0 0.0
      %595 = vmatprep.subr.mxu0 0.0
      %596 = vmatpush1.msra.mxu0 0.0
      %597 = vmatprep.subr.mxu0 0.0
      %598 = vmatpush1.msra.mxu0 0.0
      %599 = vmatprep.subr.mxu0 0.0
      %600 = vmatpush1.msra.mxu0 0.0
      %601 = vmatprep.subr.mxu0 0.0
      %602 = vmatpush1.msra.mxu0 0.0
      %603 = vmatprep.subr.mxu0 0.0
      %604 = vmatpush1.msra.mxu0 0.0
      %605 = vmatprep.subr.mxu0 0.0
      %606 = vmatpush1.msra.mxu0 0.0
      %607 = vmatprep.subr.mxu0 0.0
      %608 = vmatpush1.msra.mxu0 0.0
      %609 = vmatprep.subr.mxu0 0.0
      %610 = vmatpush1.msra.mxu0 0.0
      %611 = vmatprep.subr.mxu0 0.0
      %612 = vmatpush1.msra.mxu0 0.0
      %613 = vmatprep.subr.mxu0 0.0
      %614 = vmatpush1.msra.mxu0 0.0
      %615 = vmatprep.subr.mxu0 0.0
      %616 = vmatpush1.msra.mxu0 0.0
      %617 = vmatprep.subr.mxu0 0.0
      %618 = vmatpush1.msra.mxu0 0.0
      %619 = vmatprep.subr.mxu0 0.0
      %620 = vmatpush1.msra.mxu0 0.0
      %621 = vmatprep.subr.mxu0 0.0
      %622 = vmatpush1.msra.mxu0 0.0
      %623 = vmatprep.subr.mxu0 0.0
      %624 = vmatpush1.msra.mxu0 0.0
      %625 = vmatprep.subr.mxu0 0.0
      %626 = vmatpush1.msra.mxu0 0.0
      %627 = vmatprep.subr.mxu0 0.0
      %628 = vmatpush1.msra.mxu0 0.0
      %629 = vmatprep.subr.mxu0 0.0
      %630 = vmatpush1.msra.mxu0 0.0
      %631 = vmatprep.subr.mxu0 0.0
      %632 = vmatpush1.msra.mxu0 0.0
      %633 = vmatprep.subr.mxu0 0.0
      %634 = vmatpush1.msra.mxu0 0.0
      %635 = vmatprep.subr.mxu0 0.0
      %636 = vmatpush1.msra.mxu0 0.0
      %637 = vmatprep.subr.mxu0 0.0
      %638 = vmatpush1.msra.mxu0 0.0
      %639 = vmatprep.subr.mxu0 0.0
      %640 = vmatpush1.msra.mxu0 0.0
      %641 = vmatprep.subr.mxu0 0.0
      %642 = vmatpush1.msra.mxu0 0.0
      %643 = vmatprep.subr.mxu0 0.0
      %644 = vmatpush1.msra.mxu0 0.0
      %645 = vmatprep.subr.mxu0 0.0
      %646 = vmatpush1.msra.mxu0 0.0
      %647 = vmatprep.subr.mxu0 0.0
      %648 = vmatpush1.msra.mxu0 0.0
      %649 = vmatprep.mubr.f32.mxu0 0.0
      %650 = vmatmul.mubr.f32.gmra.mrb[0].mxu0 %v559
      %v651 = vpop.f32.mrb[0].mxu0
      %v652 = vadd.f32 %v515, %v651
      %v653 = vpop.f32.mrb[0].mxu0
      %654 = vmatprep.mubr.f32.mxu0 0.0
      %655 = vmatmul.mubr.f32.gmra.mrb[0].mxu0 %v562
      %v656 = vpop.f32.mrb[0].mxu0
      %v657 = vadd.f32 %v520, %v656
      %v658 = vpop.f32.mrb[0].mxu0
      %659 = vmatprep.mubr.f32.mxu0 0.0
      %660 = vmatmul.mubr.f32.gmra.mrb[0].mxu0 %v565
      %v661 = vpop.f32.mrb[0].mxu0
      %v662 = vadd.f32 %v525, %v661
      %v663 = vpop.f32.mrb[0].mxu0
      %664 = vmatprep.mubr.f32.mxu0 0.0
      %665 = vmatmul.mubr.f32.gmra.mrb[0].mxu0 %v568
      %v666 = vpop.f32.mrb[0].mxu0
      %v667 = vadd.f32 %v530, %v666
      %v668 = vpop.f32.mrb[0].mxu0
      %669 = vmatprep.mubr.f32.mxu0 0.0
      %670 = vmatmul.mubr.f32.gmra.mrb[0].mxu0 %v571
      %v671 = vpop.f32.mrb[0].mxu0
      %v672 = vadd.f32 %v535, %v671
      %v673 = vpop.f32.mrb[0].mxu0
      %674 = vmatprep.mubr.f32.mxu0 0.0
      %675 = vmatmul.mubr.f32.gmra.mrb[0].mxu0 %v574
      %v676 = vpop.f32.mrb[0].mxu0
      %v677 = vadd.f32 %v540, %v676
      %v678 = vpop.f32.mrb[0].mxu0
      %679 = vmatprep.mubr.f32.mxu0 0.0
      %680 = vmatmul.mubr.f32.gmra.mrb[0].mxu0 %v577
      %v681 = vpop.f32.mrb[0].mxu0
      %v682 = vadd.f32 %v545, %v681
      %v683 = vpop.f32.mrb[0].mxu0
      %684 = vmatprep.mubr.f32.mxu0 0.0
      %685 = vmatmul.mubr.f32.gmra.mrb[0].mxu0 %v580
      %v686 = vpop.f32.mrb[0].mxu0
      %v687 = vadd.f32 %v550, %v686
      %v688 = vpop.f32.mrb[0].mxu0
      %689 = vmatprep.mubr.f32.mxu0 0.0
      %690 = vmatmul.mubr.f32.gmra.mrb[0].mxu0 %v583
      %v691 = vpop.f32.mrb[0].mxu0
      %v692 = vadd.f32 %v555, %v691
      %v693 = vpop.f32.mrb[0].mxu0
      %694 = vdwg.mxu0
      %v695 = vld [vmem:[%s6] sm:$0xff]
      %v696 = vld [vmem:[%s6 + $0x8] sm:$0xff]
      %v697 = vld [vmem:[%s6 + $0x10] sm:$0xff]
      %v698 = vld [vmem:[%s6 + $0x18] sm:$0xff]
      %v699 = vld [vmem:[%s6 + $0x20] sm:$0xff]
      %v700 = vld [vmem:[%s6 + $0x28] sm:$0xff]
      %v701 = vld [vmem:[%s6 + $0x30] sm:$0xff]
      %v702 = vld [vmem:[%s6 + $0x38] sm:$0xff]
      %v703 = vld [vmem:[%s6 + $0x40] sm:$0x3]
      %705 = vset.pattern.permute.xlu0 0
      %706 = vperm.xlu0 %705, %v695
      %v707 = vpop.permute.xlu0 %706
      %710 = vset.pattern.permute.xlu0 0
      %711 = vperm.xlu0 %710, %v696
      %v712 = vpop.permute.xlu0 %711
      %715 = vset.pattern.permute.xlu0 0
      %716 = vperm.xlu0 %715, %v697
      %v717 = vpop.permute.xlu0 %716
      %720 = vset.pattern.permute.xlu0 0
      %721 = vperm.xlu0 %720, %v698
      %v722 = vpop.permute.xlu0 %721
      %725 = vset.pattern.permute.xlu0 0
      %726 = vperm.xlu0 %725, %v699
      %v727 = vpop.permute.xlu0 %726
      %730 = vset.pattern.permute.xlu0 0
      %731 = vperm.xlu0 %730, %v700
      %v732 = vpop.permute.xlu0 %731
      %735 = vset.pattern.permute.xlu0 0
      %736 = vperm.xlu0 %735, %v701
      %v737 = vpop.permute.xlu0 %736
      %740 = vset.pattern.permute.xlu0 0
      %741 = vperm.xlu0 %740, %v702
      %v742 = vpop.permute.xlu0 %741
      %745 = vset.pattern.permute.xlu0 0
      %746 = vperm.xlu0 %745, %v703
      %v747 = vpop.permute.xlu0 %746
      %v750 = vlaneseq
      %v751 = vshrl.u32 %v750, 7
      %v752 = vsub.s32 0, %v751
      %v753 = vrot.slane %v400, %v752
      %v755 = vmul.f32 %v707, %v753
      %v756 = vmul.f32 %v712, %v753
      %v757 = vmul.f32 %v717, %v753
      %v758 = vmul.f32 %v722, %v753
      %v759 = vmul.f32 %v727, %v753
      %v760 = vmul.f32 %v732, %v753
      %v761 = vmul.f32 %v737, %v753
      %v762 = vmul.f32 %v742, %v753
      %v763 = vmul.f32 %v747, %v753
      %v764 = vadd.f32 %v652, %v755
      %v765 = vadd.f32 %v657, %v756
      %v766 = vadd.f32 %v662, %v757
      %v767 = vadd.f32 %v667, %v758
      %v768 = vadd.f32 %v672, %v759
      %v769 = vadd.f32 %v677, %v760
      %v770 = vadd.f32 %v682, %v761
      %v771 = vadd.f32 %v687, %v762
      %v772 = vadd.f32 %v692, %v763
      %v773 = vld [vmem:[%s7] sm:$0xff]
      %v774 = vld [vmem:[%s7 + $0x8] sm:$0xff]
      %v775 = vld [vmem:[%s7 + $0x10] sm:$0xff]
      %v776 = vld [vmem:[%s7 + $0x18] sm:$0xff]
      %v777 = vld [vmem:[%s7 + $0x20] sm:$0xff]
      %v778 = vld [vmem:[%s7 + $0x28] sm:$0xff]
      %v779 = vld [vmem:[%s7 + $0x30] sm:$0xff]
      %v780 = vld [vmem:[%s7 + $0x38] sm:$0xff]
      %v781 = vld [vmem:[%s7 + $0x40] sm:$0x3]
      %783 = vset.pattern.permute.xlu0 0
      %784 = vperm.xlu0 %783, %v773
      %v785 = vpop.permute.xlu0 %784
      %788 = vset.pattern.permute.xlu0 0
      %789 = vperm.xlu0 %788, %v774
      %v790 = vpop.permute.xlu0 %789
      %793 = vset.pattern.permute.xlu0 0
      %794 = vperm.xlu0 %793, %v775
      %v795 = vpop.permute.xlu0 %794
      %798 = vset.pattern.permute.xlu0 0
      %799 = vperm.xlu0 %798, %v776
      %v800 = vpop.permute.xlu0 %799
      %803 = vset.pattern.permute.xlu0 0
      %804 = vperm.xlu0 %803, %v777
      %v805 = vpop.permute.xlu0 %804
      %808 = vset.pattern.permute.xlu0 0
      %809 = vperm.xlu0 %808, %v778
      %v810 = vpop.permute.xlu0 %809
      %813 = vset.pattern.permute.xlu0 0
      %814 = vperm.xlu0 %813, %v779
      %v815 = vpop.permute.xlu0 %814
      %818 = vset.pattern.permute.xlu0 0
      %819 = vperm.xlu0 %818, %v780
      %v820 = vpop.permute.xlu0 %819
      %823 = vset.pattern.permute.xlu0 0
      %824 = vperm.xlu0 %823, %v781
      %v825 = vpop.permute.xlu0 %824
      %v827 = vadd.f32 %v764, %v785
      %v828 = vadd.f32 %v765, %v790
      %v829 = vadd.f32 %v766, %v795
      %v830 = vadd.f32 %v767, %v800
      %v831 = vadd.f32 %v768, %v805
      %v832 = vadd.f32 %v769, %v810
      %v833 = vadd.f32 %v770, %v815
      %v834 = vadd.f32 %v771, %v820
      %v835 = vadd.f32 %v772, %v825
      %v836 = vmax.f32 %v827, 0.0
      %v837 = vmax.f32 %v828, 0.0
      %v838 = vmax.f32 %v829, 0.0
      %v839 = vmax.f32 %v830, 0.0
      %v840 = vmax.f32 %v831, 0.0
      %v841 = vmax.f32 %v832, 0.0
      %v842 = vmax.f32 %v833, 0.0
      %v843 = vmax.f32 %v834, 0.0
      %v844 = vmax.f32 %v835, 0.0
      %v845 = vld [vmem:[%s8] sm:$0x1f]
      %v846 = vld [vmem:[%s9] sm:$0x1f]
      %848 = vset.pattern.permute.xlu0 0
      %849 = vperm.xlu0 %848, %v846
      %v850 = vpop.permute.xlu0 %849
      %vm852 = vcmask 539648
      %v854 = vsel %vm852, %v845, 0
      %vm856 = vcmask 1041408
      %v858 = vsel %vm856, %v844, 0
      %860 = vmatprep.subr.mxu0 0.0
      %861 = vmatpush1.msra.mxu0 %v836
      %862 = vmatprep.subr.mxu0 0.0
      %863 = vmatpush1.msra.mxu0 %v837
      %864 = vmatprep.subr.mxu0 0.0
      %865 = vmatpush1.msra.mxu0 %v838
      %866 = vmatprep.subr.mxu0 0.0
      %867 = vmatpush1.msra.mxu0 %v839
      %868 = vmatprep.subr.mxu0 0.0
      %869 = vmatpush1.msra.mxu0 %v840
      %870 = vmatprep.subr.mxu0 0.0
      %871 = vmatpush1.msra.mxu0 %v841
      %872 = vmatprep.subr.mxu0 0.0
      %873 = vmatpush1.msra.mxu0 %v842
      %874 = vmatprep.subr.mxu0 0.0
      %875 = vmatpush1.msra.mxu0 %v843
      %876 = vmatprep.subr.mxu0 0.0
      %877 = vmatpush1.msra.mxu0 %v858
      %878 = vmatprep.subr.mxu0 0.0
      %879 = vmatpush1.msra.mxu0 0.0
      %880 = vmatprep.subr.mxu0 0.0
      %881 = vmatpush1.msra.mxu0 0.0
      %882 = vmatprep.subr.mxu0 0.0
      %883 = vmatpush1.msra.mxu0 0.0
      %884 = vmatprep.subr.mxu0 0.0
      %885 = vmatpush1.msra.mxu0 0.0
      %886 = vmatprep.subr.mxu0 0.0
      %887 = vmatpush1.msra.mxu0 0.0
      %888 = vmatprep.subr.mxu0 0.0
      %889 = vmatpush1.msra.mxu0 0.0
      %890 = vmatprep.subr.mxu0 0.0
      %891 = vmatpush1.msra.mxu0 0.0
      %892 = vmatprep.subr.mxu0 0.0
      %893 = vmatpush1.msra.mxu0 0.0
      %894 = vmatprep.subr.mxu0 0.0
      %895 = vmatpush1.msra.mxu0 0.0
      %896 = vmatprep.subr.mxu0 0.0
      %897 = vmatpush1.msra.mxu0 0.0
      %898 = vmatprep.subr.mxu0 0.0
      %899 = vmatpush1.msra.mxu0 0.0
      %900 = vmatprep.subr.mxu0 0.0
      %901 = vmatpush1.msra.mxu0 0.0
      %902 = vmatprep.subr.mxu0 0.0
      %903 = vmatpush1.msra.mxu0 0.0
      %904 = vmatprep.subr.mxu0 0.0
      %905 = vmatpush1.msra.mxu0 0.0
      %906 = vmatprep.subr.mxu0 0.0
      %907 = vmatpush1.msra.mxu0 0.0
      %908 = vmatprep.subr.mxu0 0.0
      %909 = vmatpush1.msra.mxu0 0.0
      %910 = vmatprep.subr.mxu0 0.0
      %911 = vmatpush1.msra.mxu0 0.0
      %912 = vmatprep.subr.mxu0 0.0
      %913 = vmatpush1.msra.mxu0 0.0
      %914 = vmatprep.subr.mxu0 0.0
      %915 = vmatpush1.msra.mxu0 0.0
      %916 = vmatprep.subr.mxu0 0.0
      %917 = vmatpush1.msra.mxu0 0.0
      %918 = vmatprep.subr.mxu0 0.0
      %919 = vmatpush1.msra.mxu0 0.0
      %920 = vmatprep.subr.mxu0 0.0
      %921 = vmatpush1.msra.mxu0 0.0
      %922 = vmatprep.subr.mxu0 0.0
      %923 = vmatpush1.msra.mxu0 0.0
      %924 = vmatprep.mubr.f32.mxu0 0.0
      %925 = vmatmul.mubr.f32.gmra.mrb[0].mxu0 %v854
      %v926 = vpop.f32.mrb[0].mxu0
      %v927 = vadd.f32 %v850, %v926
      %v928 = vpop.f32.mrb[0].mxu0
      %929 = vdwg.mxu0
      %v931 = vlaneseq
      %v932 = vshrl.u32 %v931, 7
      %v933 = vsub.s32 0, %v932
      %v934 = vrot.slane %v401, %v933
      %v936 = vmul.f32 %v927, %v934
      %vm937 = vcmask 520192
      %v938 = vsel %vm937, %v936, -inf
      %939 = vmax.xlane.f32.xlu0 %v938
      %v940 = vpop.xlane.xlu0 %939
      %v941 = vsub.f32 %v936, %v940
      %v942 = vmul.f32 %v941, 1.442695
      %v943 = vpow.pop %v942
      %v944 = vsel %vm937, %v943, 0.0
      %945 = vadd.xlane.f32.xlu0 %v944
      %v946 = vpop.xlane.xlu0 %945
      %v947 = vlog2.pop %v946
      %v948 = vmul.f32 %v947, 0.6931472
      %v949 = vadd.f32 %v940, %v948
      %v950 = vsub.f32 %v936, %v949
      %951 = vst.msk [vmem:[%s391] sm:$0x1f] %vm937, %v950
      %p952 = scmp.lt.s32.totalorder %s21, 1
      %s953 = scalar_select %p952, %s21, 1
      %s954 = smul.addr %s953, 8
      %s955 = scalar_lea.vmem %s10, %s954
      // Predicated region
      $region61: #{bert_classifier_forward.1} parent=59 // pred_check
        %p956 = pneg %p264
      $region62: #{bert_classifier_forward.1} parent=59 // pred_check_branch
        %958 = sbr.rel (%p956) target = $region64
      $region63: #{bert_classifier_forward.1} parent=59 // pred_region
        _
      $region64: #{bert_classifier_forward.1} parent=59 // pred_fallthru
        _
    $region60: #{bert_classifier_forward.1} parent=5 // pred_fallthru
      _
    %p959 = scmp.le.s32.totalorder 2, %s16
    // Predicated region
    $region65: #{bert_classifier_forward.1} parent=5 // pred_check
      %p960 = pneg %p959
    $region66: #{bert_classifier_forward.1} parent=5 // pred_check_branch
      %962 = sbr.rel (%p960) target = $region68
    $region67: #{bert_classifier_forward.1} parent=5 // pred_region
      %s963 = ssub.s32 %s16, 2
      // Predicated region
      $region69: #{bert_classifier_forward.1} parent=67 // pred_check
        %p964 = pneg %p270
      $region70: #{bert_classifier_forward.1} parent=67 // pred_check_branch
        %966 = sbr.rel (%p964) target = $region72
      $region71: #{bert_classifier_forward.1} parent=67 // pred_region
        %p967 = scmp.lt.s32.totalorder %s22, 1
        %s968 = scalar_select %p967, %s22, 1
        %s969 = smul.addr %s968, 8
        %s970 = scalar_lea.vmem %s10, %s969
      $region72: #{bert_classifier_forward.1} parent=67 // pred_fallthru
        _
    $region68: #{bert_classifier_forward.1} parent=5 // pred_fallthru
      _
  $region6: #{bert_classifier_forward.1} parent=0 // loop_footer
    %s20 = sadd.s32 1, %s16
  $region7: #{bert_classifier_forward.1} parent=0 // loop_footer_branch
    %15 = sbr.rel target = $region3
  $region8: #{bert_classifier_forward.1} parent=0 // loop_exit
    _

</llo_original>
